<compile_context>
chip_gen: v5e
topology: v5e:2x2
jax: 0.10.0
libtpu: 0.0.40
codegen_flags: <defaults>
</compile_context>

<pallas_src>
import jax
import jax.numpy as jnp
from jax import lax
from jax.experimental import pallas as pl
from jax.experimental.pallas import tpu as pltpu

# Sobel cross-correlation kernels (F.conv2d is cross-correlation) -- used only
# by the pure-JAX reference below.
_KX = ((-1.0, 0.0, 1.0),
       (-2.0, 0.0, 2.0),
       (-1.0, 0.0, 1.0))
_KY = ((1.0, 2.0, 1.0),
       (0.0, 0.0, 0.0),
       (-1.0, -2.0, -1.0))


def _make_l_grad_kernel(H, W, rows):
    """Kernel over a (rows=Bt*H, W) block holding Bt stacked images."""

    def kernel(a_ref, b_ref, f_ref, rowmask_ref, out_ref):
        # Row masks (per *image* row) come in as a tiny f32 input so sublane
        # rolls never leak between the Bt images stacked inside one block.
        above_m = rowmask_ref[:, 0:1]          # (rows, 1): 1.0 iff y % H != 0
        below_m = rowmask_ref[:, 1:2]          # (rows, 1): 1.0 iff y % H != H-1
        # Column masks built in-kernel (lane iota + compare, no captured consts).
        col = lax.broadcasted_iota(jnp.int32, (rows, W), 1)
        left_m = (col != 0).astype(jnp.float32)
        right_m = (col != W - 1).astype(jnp.float32)

        def above(x):   # x[y-1, :]  (0 at the first row of each image)
            return pltpu.roll(x, 1, axis=0) * above_m

        def below(x):   # x[y+1, :]  (0 at the last row of each image)
            return pltpu.roll(x, rows - 1, axis=0) * below_m

        def left(x):    # x[:, c-1]  (0 at column 0)
            return pltpu.roll(x, 1, axis=1) * left_m

        def right(x):   # x[:, c+1]  (0 at column W-1)
            return pltpu.roll(x, W - 1, axis=1) * right_m

        def sobel_grad(x):
            # Separable Sobel:  Kx = [1,2,1]^T x [-1,0,1],  Ky = [1,0,-1]^T x [1,2,1]
            v = above(x) + 2.0 * x + below(x)     # vertical [1,2,1]
            sx = right(v) - left(v)               # horizontal [-1,0,1]
            h = left(x) + 2.0 * x + right(x)      # horizontal [1,2,1]
            sy = above(h) - below(h)              # vertical [1,0,-1]
            return jnp.abs(sx) + jnp.abs(sy)

        ga = sobel_grad(a_ref[...].astype(jnp.float32))
        gb = sobel_grad(b_ref[...].astype(jnp.float32))
        gf = sobel_grad(f_ref[...].astype(jnp.float32))

        partial = jnp.sum(jnp.abs(gf - jnp.maximum(ga, gb)))
        # Lane-dense (8,128) tile per block (unmasked vst); host reads [:,0,0].
        out_ref[...] = jnp.full(out_ref.shape, partial, jnp.float32)

    return kernel


def _pick_batch_tile(N, H, W, itemsize):
    """Largest divisor of N keeping 3 inputs x 2 pipeline buffers (plus f32
    intermediates) comfortably inside scoped VMEM and Bt*H sublane-tileable."""
    budget_per_input_block = 512 * 1024          # bytes
    per_img = H * W * itemsize
    max_bt = max(1, budget_per_input_block // max(1, per_img))
    for bt in range(min(N, max_bt), 0, -1):
        if N % bt == 0 and ((bt * H) % 8 == 0 or bt == N):
            return bt
    return N  # fall back: one block covering the whole batch (always legal)


def l_grad(image_A, image_B, image_fused):
    """image_*: (N, 1, H, W) (NCHW, single channel). Returns scalar loss."""
    assert image_A.shape == image_B.shape == image_fused.shape
    N, C, H, W = image_A.shape
    assert C == 1, "Sobelxy uses a [1,1,3,3] weight -> single input channel"

    Bt = _pick_batch_tile(N, H, W, jnp.dtype(image_A.dtype).itemsize)
    num_blocks = N // Bt
    rows = Bt * H

    # (N,1,H,W) -> (N*H, W): contiguous dim merge, no data movement in HBM.
    a2 = image_A.reshape(N * H, W)
    b2 = image_B.reshape(N * H, W)
    f2 = image_fused.reshape(N * H, W)

    # Per-row neighbour-existence masks (same for every block since all blocks
    # hold Bt whole images): col 0 = "has a row above inside its image",
    # col 1 = "has a row below inside its image".
    rin = jnp.arange(rows, dtype=jnp.int32) % H
    row_mask = jnp.stack([(rin != 0).astype(jnp.float32),
                          (rin != H - 1).astype(jnp.float32)], axis=1)  # (rows, 2)

    img_spec = pl.BlockSpec((rows, W), lambda i: (i, 0))
    mask_spec = pl.BlockSpec((rows, 2), lambda i: (0, 0))   # same block every step
    out_spec = pl.BlockSpec((1, 8, 128), lambda i: (i, 0, 0))

    partials = pl.pallas_call(
        _make_l_grad_kernel(H, W, rows),
        out_shape=jax.ShapeDtypeStruct((num_blocks, 8, 128), jnp.float32),
        grid_spec=pltpu.PrefetchScalarGridSpec(
            num_scalar_prefetch=0,
            grid=(num_blocks,),
            in_specs=[img_spec, img_spec, img_spec, mask_spec],
            out_specs=out_spec,
        ),
        compiler_params=pltpu.CompilerParams(
            dimension_semantics=("parallel",),
            vmem_limit_bytes=32 * 1024 * 1024,
        ),
    )(a2, b2, f2, row_mask)

    total = jnp.sum(partials[:, 0, 0])
    # F.l1_loss default reduction='mean' over N*C*H*W elements.
    return total / jnp.float32(N * C * H * W)


def _l_grad_ref(image_A, image_B, image_fused):
    """Pure-JAX reference for verification (explicit padded 3x3 conv)."""
    kx = jnp.array(_KX, jnp.float32)
    ky = jnp.array(_KY, jnp.float32)

    def grad(x):
        x = x[:, 0].astype(jnp.float32)
        p = jnp.pad(x, ((0, 0), (1, 1), (1, 1)))
        H, W = x.shape[1], x.shape[2]
        sx = sum(kx[i, j] * p[:, i:i + H, j:j + W] for i in range(3) for j in range(3))
        sy = sum(ky[i, j] * p[:, i:i + H, j:j + W] for i in range(3) for j in range(3))
        return jnp.abs(sx) + jnp.abs(sy)

    ga, gb, gf = grad(image_A), grad(image_B), grad(image_fused)
    return jnp.mean(jnp.abs(gf - jnp.maximum(ga, gb)))


if __name__ == "__main__":
    key = jax.random.PRNGKey(0)
    k1, k2, k3 = jax.random.split(key, 3)
    shape = (2, 1, 16, 16)  # N, C=1, H, W
    image_A = jax.random.uniform(k1, shape, jnp.float32)
    image_B = jax.random.uniform(k2, shape, jnp.float32)
    image_F = jax.random.uniform(k3, shape, jnp.float32)

    loss = jax.block_until_ready(l_grad(image_A, image_B, image_F))
    ref = jax.block_until_ready(_l_grad_ref(image_A, image_B, image_F))
    assert jnp.allclose(loss, ref, rtol=1e-5, atol=1e-5), (loss, ref)
    print("KERNEL_OK")
</pallas_src>

<mosaic_0001>
module attributes {stable_mosaic.version = 11 : i64} {
  func.func @kernel(%arg0: i32, %arg1: memref<32x16xf32, #tpu.memory_space<vmem>>, %arg2: memref<32x16xf32, #tpu.memory_space<vmem>>, %arg3: memref<32x16xf32, #tpu.memory_space<vmem>>, %arg4: memref<32x2xf32, #tpu.memory_space<vmem>>, %arg5: memref<1x8x128xf32, #tpu.memory_space<vmem>>) attributes {dimension_semantics = [#tpu.dimension_semantics<parallel>], iteration_bounds = array<i64: 1>, scalar_prefetch = 0 : i64, scratch_operands = 0 : i64, tpu.core_type = #tpu.core_type<tc>, window_params = [{transform_indices = @transform_0, window_bounds = array<i64: 32, 16>}, {transform_indices = @transform_1, window_bounds = array<i64: 32, 16>}, {transform_indices = @transform_2, window_bounds = array<i64: 32, 16>}, {pipeline_mode = #tpu.pipeline_mode<synchronous>, transform_indices = @transform_3, window_bounds = array<i64: 32, 2>}, {transform_indices = @transform_4, window_bounds = array<i64: 1, 8, 128>}]} {
    %c0 = arith.constant 0 : index
    %c0_0 = arith.constant 0 : index
    %0 = vector.load %arg4[%c0, %c0_0] : memref<32x2xf32, #tpu.memory_space<vmem>>, vector<32x1xf32>
    %c0_1 = arith.constant 0 : index
    %c1 = arith.constant 1 : index
    %1 = vector.load %arg4[%c0_1, %c1] : memref<32x2xf32, #tpu.memory_space<vmem>>, vector<32x1xf32>
    %2 = tpu.iota {dimensions = array<i32: 1>} : vector<32x16xi32>
    %c0_i32 = arith.constant 0 : i32
    %3 = vector.broadcast %c0_i32 : i32 to vector<32x16xi32>
    %4 = arith.cmpi ne, %2, %3 : vector<32x16xi32>
    %5 = arith.extui %4 : vector<32x16xi1> to vector<32x16xi32>
    %6 = arith.sitofp %5 : vector<32x16xi32> to vector<32x16xf32>
    %c15_i32 = arith.constant 15 : i32
    %7 = vector.broadcast %c15_i32 : i32 to vector<32x16xi32>
    %8 = arith.cmpi ne, %2, %7 : vector<32x16xi32>
    %9 = arith.extui %8 : vector<32x16xi1> to vector<32x16xi32>
    %10 = arith.sitofp %9 : vector<32x16xi32> to vector<32x16xf32>
    %c0_2 = arith.constant 0 : index
    %c0_3 = arith.constant 0 : index
    %11 = vector.load %arg1[%c0_2, %c0_3] : memref<32x16xf32, #tpu.memory_space<vmem>>, vector<32x16xf32>
    %c1_i32 = arith.constant 1 : i32
    %12 = tpu.dynamic_rotate %11 by %c1_i32 dim 0 : vector<32x16xf32>, i32 -> vector<32x16xf32>
    %13 = vector.broadcast %0 : vector<32x1xf32> to vector<32x16xf32>
    %14 = arith.mulf %12, %13 : vector<32x16xf32>
    %cst = arith.constant 2.000000e+00 : f32
    %15 = vector.broadcast %cst : f32 to vector<32x16xf32>
    %16 = arith.mulf %15, %11 : vector<32x16xf32>
    %17 = arith.addf %14, %16 : vector<32x16xf32>
    %c31_i32 = arith.constant 31 : i32
    %18 = tpu.dynamic_rotate %11 by %c31_i32 dim 0 : vector<32x16xf32>, i32 -> vector<32x16xf32>
    %19 = vector.broadcast %1 : vector<32x1xf32> to vector<32x16xf32>
    %20 = arith.mulf %18, %19 : vector<32x16xf32>
    %21 = arith.addf %17, %20 : vector<32x16xf32>
    %c15_i32_4 = arith.constant 15 : i32
    %22 = tpu.dynamic_rotate %21 by %c15_i32_4 dim 1 : vector<32x16xf32>, i32 -> vector<32x16xf32>
    %23 = arith.mulf %22, %10 : vector<32x16xf32>
    %c1_i32_5 = arith.constant 1 : i32
    %24 = tpu.dynamic_rotate %21 by %c1_i32_5 dim 1 : vector<32x16xf32>, i32 -> vector<32x16xf32>
    %25 = arith.mulf %24, %6 : vector<32x16xf32>
    %26 = arith.subf %23, %25 : vector<32x16xf32>
    %c1_i32_6 = arith.constant 1 : i32
    %27 = tpu.dynamic_rotate %11 by %c1_i32_6 dim 1 : vector<32x16xf32>, i32 -> vector<32x16xf32>
    %28 = arith.mulf %27, %6 : vector<32x16xf32>
    %cst_7 = arith.constant 2.000000e+00 : f32
    %29 = vector.broadcast %cst_7 : f32 to vector<32x16xf32>
    %30 = arith.mulf %29, %11 : vector<32x16xf32>
    %31 = arith.addf %28, %30 : vector<32x16xf32>
    %c15_i32_8 = arith.constant 15 : i32
    %32 = tpu.dynamic_rotate %11 by %c15_i32_8 dim 1 : vector<32x16xf32>, i32 -> vector<32x16xf32>
    %33 = arith.mulf %32, %10 : vector<32x16xf32>
    %34 = arith.addf %31, %33 : vector<32x16xf32>
    %c1_i32_9 = arith.constant 1 : i32
    %35 = tpu.dynamic_rotate %34 by %c1_i32_9 dim 0 : vector<32x16xf32>, i32 -> vector<32x16xf32>
    %36 = vector.broadcast %0 : vector<32x1xf32> to vector<32x16xf32>
    %37 = arith.mulf %35, %36 : vector<32x16xf32>
    %c31_i32_10 = arith.constant 31 : i32
    %38 = tpu.dynamic_rotate %34 by %c31_i32_10 dim 0 : vector<32x16xf32>, i32 -> vector<32x16xf32>
    %39 = vector.broadcast %1 : vector<32x1xf32> to vector<32x16xf32>
    %40 = arith.mulf %38, %39 : vector<32x16xf32>
    %41 = arith.subf %37, %40 : vector<32x16xf32>
    %42 = math.absf %26 : vector<32x16xf32>
    %43 = math.absf %41 : vector<32x16xf32>
    %44 = arith.addf %42, %43 : vector<32x16xf32>
    %c0_11 = arith.constant 0 : index
    %c0_12 = arith.constant 0 : index
    %45 = vector.load %arg2[%c0_11, %c0_12] : memref<32x16xf32, #tpu.memory_space<vmem>>, vector<32x16xf32>
    %c1_i32_13 = arith.constant 1 : i32
    %46 = tpu.dynamic_rotate %45 by %c1_i32_13 dim 0 : vector<32x16xf32>, i32 -> vector<32x16xf32>
    %47 = vector.broadcast %0 : vector<32x1xf32> to vector<32x16xf32>
    %48 = arith.mulf %46, %47 : vector<32x16xf32>
    %cst_14 = arith.constant 2.000000e+00 : f32
    %49 = vector.broadcast %cst_14 : f32 to vector<32x16xf32>
    %50 = arith.mulf %49, %45 : vector<32x16xf32>
    %51 = arith.addf %48, %50 : vector<32x16xf32>
    %c31_i32_15 = arith.constant 31 : i32
    %52 = tpu.dynamic_rotate %45 by %c31_i32_15 dim 0 : vector<32x16xf32>, i32 -> vector<32x16xf32>
    %53 = vector.broadcast %1 : vector<32x1xf32> to vector<32x16xf32>
    %54 = arith.mulf %52, %53 : vector<32x16xf32>
    %55 = arith.addf %51, %54 : vector<32x16xf32>
    %c15_i32_16 = arith.constant 15 : i32
    %56 = tpu.dynamic_rotate %55 by %c15_i32_16 dim 1 : vector<32x16xf32>, i32 -> vector<32x16xf32>
    %57 = arith.mulf %56, %10 : vector<32x16xf32>
    %c1_i32_17 = arith.constant 1 : i32
    %58 = tpu.dynamic_rotate %55 by %c1_i32_17 dim 1 : vector<32x16xf32>, i32 -> vector<32x16xf32>
    %59 = arith.mulf %58, %6 : vector<32x16xf32>
    %60 = arith.subf %57, %59 : vector<32x16xf32>
    %c1_i32_18 = arith.constant 1 : i32
    %61 = tpu.dynamic_rotate %45 by %c1_i32_18 dim 1 : vector<32x16xf32>, i32 -> vector<32x16xf32>
    %62 = arith.mulf %61, %6 : vector<32x16xf32>
    %cst_19 = arith.constant 2.000000e+00 : f32
    %63 = vector.broadcast %cst_19 : f32 to vector<32x16xf32>
    %64 = arith.mulf %63, %45 : vector<32x16xf32>
    %65 = arith.addf %62, %64 : vector<32x16xf32>
    %c15_i32_20 = arith.constant 15 : i32
    %66 = tpu.dynamic_rotate %45 by %c15_i32_20 dim 1 : vector<32x16xf32>, i32 -> vector<32x16xf32>
    %67 = arith.mulf %66, %10 : vector<32x16xf32>
    %68 = arith.addf %65, %67 : vector<32x16xf32>
    %c1_i32_21 = arith.constant 1 : i32
    %69 = tpu.dynamic_rotate %68 by %c1_i32_21 dim 0 : vector<32x16xf32>, i32 -> vector<32x16xf32>
    %70 = vector.broadcast %0 : vector<32x1xf32> to vector<32x16xf32>
    %71 = arith.mulf %69, %70 : vector<32x16xf32>
    %c31_i32_22 = arith.constant 31 : i32
    %72 = tpu.dynamic_rotate %68 by %c31_i32_22 dim 0 : vector<32x16xf32>, i32 -> vector<32x16xf32>
    %73 = vector.broadcast %1 : vector<32x1xf32> to vector<32x16xf32>
    %74 = arith.mulf %72, %73 : vector<32x16xf32>
    %75 = arith.subf %71, %74 : vector<32x16xf32>
    %76 = math.absf %60 : vector<32x16xf32>
    %77 = math.absf %75 : vector<32x16xf32>
    %78 = arith.addf %76, %77 : vector<32x16xf32>
    %c0_23 = arith.constant 0 : index
    %c0_24 = arith.constant 0 : index
    %79 = vector.load %arg3[%c0_23, %c0_24] : memref<32x16xf32, #tpu.memory_space<vmem>>, vector<32x16xf32>
    %c1_i32_25 = arith.constant 1 : i32
    %80 = tpu.dynamic_rotate %79 by %c1_i32_25 dim 0 : vector<32x16xf32>, i32 -> vector<32x16xf32>
    %81 = vector.broadcast %0 : vector<32x1xf32> to vector<32x16xf32>
    %82 = arith.mulf %80, %81 : vector<32x16xf32>
    %cst_26 = arith.constant 2.000000e+00 : f32
    %83 = vector.broadcast %cst_26 : f32 to vector<32x16xf32>
    %84 = arith.mulf %83, %79 : vector<32x16xf32>
    %85 = arith.addf %82, %84 : vector<32x16xf32>
    %c31_i32_27 = arith.constant 31 : i32
    %86 = tpu.dynamic_rotate %79 by %c31_i32_27 dim 0 : vector<32x16xf32>, i32 -> vector<32x16xf32>
    %87 = vector.broadcast %1 : vector<32x1xf32> to vector<32x16xf32>
    %88 = arith.mulf %86, %87 : vector<32x16xf32>
    %89 = arith.addf %85, %88 : vector<32x16xf32>
    %c15_i32_28 = arith.constant 15 : i32
    %90 = tpu.dynamic_rotate %89 by %c15_i32_28 dim 1 : vector<32x16xf32>, i32 -> vector<32x16xf32>
    %91 = arith.mulf %90, %10 : vector<32x16xf32>
    %c1_i32_29 = arith.constant 1 : i32
    %92 = tpu.dynamic_rotate %89 by %c1_i32_29 dim 1 : vector<32x16xf32>, i32 -> vector<32x16xf32>
    %93 = arith.mulf %92, %6 : vector<32x16xf32>
    %94 = arith.subf %91, %93 : vector<32x16xf32>
    %c1_i32_30 = arith.constant 1 : i32
    %95 = tpu.dynamic_rotate %79 by %c1_i32_30 dim 1 : vector<32x16xf32>, i32 -> vector<32x16xf32>
    %96 = arith.mulf %95, %6 : vector<32x16xf32>
    %cst_31 = arith.constant 2.000000e+00 : f32
    %97 = vector.broadcast %cst_31 : f32 to vector<32x16xf32>
    %98 = arith.mulf %97, %79 : vector<32x16xf32>
    %99 = arith.addf %96, %98 : vector<32x16xf32>
    %c15_i32_32 = arith.constant 15 : i32
    %100 = tpu.dynamic_rotate %79 by %c15_i32_32 dim 1 : vector<32x16xf32>, i32 -> vector<32x16xf32>
    %101 = arith.mulf %100, %10 : vector<32x16xf32>
    %102 = arith.addf %99, %101 : vector<32x16xf32>
    %c1_i32_33 = arith.constant 1 : i32
    %103 = tpu.dynamic_rotate %102 by %c1_i32_33 dim 0 : vector<32x16xf32>, i32 -> vector<32x16xf32>
    %104 = vector.broadcast %0 : vector<32x1xf32> to vector<32x16xf32>
    %105 = arith.mulf %103, %104 : vector<32x16xf32>
    %c31_i32_34 = arith.constant 31 : i32
    %106 = tpu.dynamic_rotate %102 by %c31_i32_34 dim 0 : vector<32x16xf32>, i32 -> vector<32x16xf32>
    %107 = vector.broadcast %1 : vector<32x1xf32> to vector<32x16xf32>
    %108 = arith.mulf %106, %107 : vector<32x16xf32>
    %109 = arith.subf %105, %108 : vector<32x16xf32>
    %110 = math.absf %94 : vector<32x16xf32>
    %111 = math.absf %109 : vector<32x16xf32>
    %112 = arith.addf %110, %111 : vector<32x16xf32>
    %113 = arith.maximumf %44, %78 : vector<32x16xf32>
    %114 = arith.subf %112, %113 : vector<32x16xf32>
    %115 = math.absf %114 : vector<32x16xf32>
    %116 = vector.shape_cast %115 : vector<32x16xf32> to vector<1x32x16xf32>
    %cst_35 = arith.constant dense<0.000000e+00> : vector<1xf32>
    %117 = vector.multi_reduction <add>, %116, %cst_35 [1, 2] : vector<1x32x16xf32> to vector<1xf32>
    %118 = vector.shape_cast %117 : vector<1xf32> to vector<1x1x1xf32>
    %119 = vector.extract %118[0, 0, 0] : f32 from vector<1x1x1xf32>
    %120 = vector.broadcast %119 : f32 to vector<1x8x128xf32>
    %c0_36 = arith.constant 0 : index
    %c0_37 = arith.constant 0 : index
    %c0_38 = arith.constant 0 : index
    %121 = vector.load %arg5[%c0_36, %c0_37, %c0_38] : memref<1x8x128xf32, #tpu.memory_space<vmem>>, vector<1x8x128xf32>
    tpu.vector_store %arg5[%c0_36, %c0_37, %c0_38], %120 {strides = array<i32>} : memref<1x8x128xf32, #tpu.memory_space<vmem>>, vector<1x8x128xf32>,
    return
  }
  func.func @transform_0(%arg0: i32) -> (i32, i32) {
    %c0_i32 = arith.constant 0 : i32
    %c0_i32_0 = arith.constant 0 : i32
    return %arg0, %c0_i32 : i32, i32
  }
  func.func @transform_1(%arg0: i32) -> (i32, i32) {
    %c0_i32 = arith.constant 0 : i32
    %c0_i32_0 = arith.constant 0 : i32
    return %arg0, %c0_i32 : i32, i32
  }
  func.func @transform_2(%arg0: i32) -> (i32, i32) {
    %c0_i32 = arith.constant 0 : i32
    %c0_i32_0 = arith.constant 0 : i32
    return %arg0, %c0_i32 : i32, i32
  }
  func.func @transform_3(%arg0: i32) -> (i32, i32) {
    %c0_i32 = arith.constant 0 : i32
    %c0_i32_0 = arith.constant 0 : i32
    %c0_i32_1 = arith.constant 0 : i32
    return %c0_i32, %c0_i32_0 : i32, i32
  }
  func.func @transform_4(%arg0: i32) -> (i32, i32, i32) {
    %c0_i32 = arith.constant 0 : i32
    %c0_i32_0 = arith.constant 0 : i32
    %c0_i32_1 = arith.constant 0 : i32
    return %arg0, %c0_i32, %c0_i32_0 : i32, i32, i32
  }
}

</mosaic_0001>

<llo_original>
// kernel: tpu_custom_call.1
$region0: #{tpu_custom_call.1}
  #allocation0 [shape = 'u32[]', space=smem, size = 0x4, offset = 0x4, fixed_abs, tag = 'smem constant byte address 0x4 - core index']
  #allocation1 [shape = 'u32[72,128]{1,0:T(1,128)}', space=vmem, size = 0x9000, scoped, tag = 'internal scratch']
  %s0 = inlined_call_operand.vmem [shape: f32[32,16], index: 0, kind: input, shape index: {}]
  %s1 = inlined_call_operand.vmem [shape: f32[32,16], index: 1, kind: input, shape index: {}]
  %s2 = inlined_call_operand.vmem [shape: f32[32,16], index: 2, kind: input, shape index: {}]
  %s3 = inlined_call_operand.vmem [shape: f32[32,2], index: 3, kind: input, shape index: {}]
  %s4 = inlined_call_operand.hbm [shape: f32[1,8,128], index: 4, kind: output, shape index: {}]
  %s5 = sld [smem:[#allocation0]]
  $region26: #{tpu_custom_call.1} parent=0
    _
  %s7 = ssub.s32 1, %s5
  %s8 = scalar_select 0, %s7, %s5
  $region1: #{tpu_custom_call.1} parent=0
    #allocation2 [shape = 'u8[4096]{0}', space=vmem, size = 0x1000, scoped, tag = 'output window, operand 0, single buffered']
    #allocation3 [shape = 's32[1]{0}', space=sflag, size = 0x4, scoped, tag = 'scoped memory for tpu_custom_call.1']
    %9 = vsyncpa [#allocation3], 0
    // Predicated region
    $region2: #{tpu_custom_call.1} parent=1 // pred_check
      _
    $region3: #{tpu_custom_call.1} parent=1 // pred_check_branch
      %11 = sbr.rel (0) target = $region5
    $region4: #{tpu_custom_call.1} parent=1 // pred_region
      _
    $region5: #{tpu_custom_call.1} parent=1 // pred_fallthru
      _
    // Predicated region
    $region6: #{tpu_custom_call.1} parent=1 // pred_check
      _
    $region7: #{tpu_custom_call.1} parent=1 // pred_check_branch
      %13 = sbr.rel (0) target = $region9
    $region8: #{tpu_custom_call.1} parent=1 // pred_region
      _
    $region9: #{tpu_custom_call.1} parent=1 // pred_fallthru
      _
    // Predicated region
    $region10: #{tpu_custom_call.1} parent=1 // pred_check
      _
    $region11: #{tpu_custom_call.1} parent=1 // pred_check_branch
      %15 = sbr.rel (0) target = $region13
    $region12: #{tpu_custom_call.1} parent=1 // pred_region
      _
    $region13: #{tpu_custom_call.1} parent=1 // pred_fallthru
      _
    // Predicated region
    $region14: #{tpu_custom_call.1} parent=1 // pred_check
      _
    $region15: #{tpu_custom_call.1} parent=1 // pred_check_branch
      %17 = sbr.rel (0) target = $region17
    $region16: #{tpu_custom_call.1} parent=1 // pred_region
      _
    $region17: #{tpu_custom_call.1} parent=1 // pred_fallthru
      _
    %v18 = vld [vmem:[%s3] sm:$0xff]
    %v19 = vld [vmem:[%s3 + $0x8] sm:$0xff]
    %v20 = vld [vmem:[%s3 + $0x10] sm:$0xff]
    %v21 = vld [vmem:[%s3 + $0x18] sm:$0xff]
    %v22 = vlaneseq
    %v23 = vand.u32 %v22, 127
    %vm24 = vcmp.ne.s32.totalorder %v23, 0
    %v25 = vsel %vm24, 1, 0
    %v26 = vcvt.s32.f32 %v25
    %vm27 = vcmp.ne.s32.totalorder %v23, 15
    %v28 = vsel %vm27, 1, 0
    %v29 = vcvt.s32.f32 %v28
    %v30 = vld [vmem:[%s0] sm:$0xff]
    %v31 = vld [vmem:[%s0 + $0x8] sm:$0xff]
    %v32 = vld [vmem:[%s0 + $0x10] sm:$0xff]
    %v33 = vld [vmem:[%s0 + $0x18] sm:$0xff]
    %v34 = vrot.slane %v30, 7
    %v35 = vrot.slane %v31, 7
    %v36 = vrot.slane %v32, 7
    %v37 = vrot.slane %v33, 7
    %v38 = vlaneseq
    %v39 = vshrl.u32 %v38, 7
    %vm40 = vcmp.lt.s32.totalorder %v39, 1
    %v41 = vsel %vm40, %v36, %v37
    %v42 = vsel %vm40, %v35, %v36
    %v43 = vsel %vm40, %v34, %v35
    %v44 = vsel %vm40, %v37, %v34
    %46 = vset.pattern.permute.xlu0 0
    %47 = vperm.xlu0 %46, %v18
    %v48 = vpop.permute.xlu0 %47
    %51 = vset.pattern.permute.xlu0 0
    %52 = vperm.xlu0 %51, %v19
    %v53 = vpop.permute.xlu0 %52
    %56 = vset.pattern.permute.xlu0 0
    %57 = vperm.xlu0 %56, %v20
    %v58 = vpop.permute.xlu0 %57
    %61 = vset.pattern.permute.xlu0 0
    %62 = vperm.xlu0 %61, %v21
    %v63 = vpop.permute.xlu0 %62
    %v65 = vmul.f32 %v44, %v48
    %v66 = vmul.f32 %v43, %v53
    %v67 = vmul.f32 %v42, %v58
    %v68 = vmul.f32 %v41, %v63
    %v69 = vmul.f32 %v30, 2.0
    %v70 = vmul.f32 %v31, 2.0
    %v71 = vmul.f32 %v32, 2.0
    %v72 = vmul.f32 %v33, 2.0
    %v73 = vadd.f32 %v65, %v69
    %v74 = vadd.f32 %v66, %v70
    %v75 = vadd.f32 %v67, %v71
    %v76 = vadd.f32 %v68, %v72
    %v77 = vrot.slane %v30, 1
    %v78 = vrot.slane %v31, 1
    %v79 = vrot.slane %v32, 1
    %v80 = vrot.slane %v33, 1
    %vm81 = vcmp.lt.s32.totalorder %v39, 7
    %v82 = vsel %vm81, %v79, %v80
    %v83 = vsel %vm81, %v78, %v79
    %v84 = vsel %vm81, %v77, %v78
    %v85 = vsel %vm81, %v80, %v77
    %86 = vset.pattern.permute.xlu0 1
    %87 = vperm.xlu0 %86, %v18
    %v88 = vpop.permute.xlu0 %87
    %90 = vset.pattern.permute.xlu0 1
    %91 = vperm.xlu0 %90, %v19
    %v92 = vpop.permute.xlu0 %91
    %94 = vset.pattern.permute.xlu0 1
    %95 = vperm.xlu0 %94, %v20
    %v96 = vpop.permute.xlu0 %95
    %98 = vset.pattern.permute.xlu0 1
    %99 = vperm.xlu0 %98, %v21
    %v100 = vpop.permute.xlu0 %99
    %v102 = vmul.f32 %v84, %v88
    %v103 = vmul.f32 %v83, %v92
    %v104 = vmul.f32 %v82, %v96
    %v105 = vmul.f32 %v85, %v100
    %v106 = vadd.f32 %v73, %v102
    %v107 = vadd.f32 %v74, %v103
    %v108 = vadd.f32 %v75, %v104
    %v109 = vadd.f32 %v76, %v105
    %vm110 = vcmask 1047680
    %111 = vrot.lane.b32.xlu0 %v106, 16
    %v112 = vpop.permute.xlu0 %111
    %v113 = vsel %vm110, %v112, %v106
    %114 = vrot.lane.b32.xlu0 %v107, 16
    %v115 = vpop.permute.xlu0 %114
    %v116 = vsel %vm110, %v115, %v107
    %117 = vrot.lane.b32.xlu0 %v108, 16
    %v118 = vpop.permute.xlu0 %117
    %v119 = vsel %vm110, %v118, %v108
    %120 = vrot.lane.b32.xlu0 %v109, 16
    %v121 = vpop.permute.xlu0 %120
    %v122 = vsel %vm110, %v121, %v109
    %123 = vrot.lane.b32.xlu0 %v113, 16
    %v124 = vpop.permute.xlu0 %123
    %125 = vrot.lane.b32.xlu0 %v116, 16
    %v126 = vpop.permute.xlu0 %125
    %127 = vrot.lane.b32.xlu0 %v119, 16
    %v128 = vpop.permute.xlu0 %127
    %129 = vrot.lane.b32.xlu0 %v122, 16
    %v130 = vpop.permute.xlu0 %129
    %v131 = vsel %vm110, %v124, %v106
    %v132 = vsel %vm110, %v126, %v107
    %v133 = vsel %vm110, %v128, %v108
    %v134 = vsel %vm110, %v130, %v109
    %136 = vrot.lane.b32.xlu0 %v29, 1
    %v137 = vpop.permute.xlu0 %136
    %v139 = vmul.f32 %v131, %v137
    %v140 = vmul.f32 %v132, %v137
    %v141 = vmul.f32 %v133, %v137
    %v142 = vmul.f32 %v134, %v137
    %144 = vrot.lane.b32.xlu0 %v26, 15
    %v145 = vpop.permute.xlu0 %144
    %v147 = vmul.f32 %v131, %v145
    %v148 = vmul.f32 %v132, %v145
    %v149 = vmul.f32 %v133, %v145
    %v150 = vmul.f32 %v134, %v145
    %155 = vrot.lane.b32.xlu0 %v147, 114
    %v156 = vpop.permute.xlu0 %155
    %157 = vrot.lane.b32.xlu0 %v148, 114
    %v158 = vpop.permute.xlu0 %157
    %159 = vrot.lane.b32.xlu0 %v149, 114
    %v160 = vpop.permute.xlu0 %159
    %161 = vrot.lane.b32.xlu0 %v150, 114
    %v162 = vpop.permute.xlu0 %161
    %v167 = vsub.f32 %v139, %v156
    %v168 = vsub.f32 %v140, %v158
    %v169 = vsub.f32 %v141, %v160
    %v170 = vsub.f32 %v142, %v162
    %171 = vrot.lane.b32.xlu0 %v30, 16
    %v172 = vpop.permute.xlu0 %171
    %v173 = vsel %vm110, %v172, %v30
    %174 = vrot.lane.b32.xlu0 %v31, 16
    %v175 = vpop.permute.xlu0 %174
    %v176 = vsel %vm110, %v175, %v31
    %177 = vrot.lane.b32.xlu0 %v32, 16
    %v178 = vpop.permute.xlu0 %177
    %v179 = vsel %vm110, %v178, %v32
    %180 = vrot.lane.b32.xlu0 %v33, 16
    %v181 = vpop.permute.xlu0 %180
    %v182 = vsel %vm110, %v181, %v33
    %183 = vrot.lane.b32.xlu0 %v173, 16
    %v184 = vpop.permute.xlu0 %183
    %185 = vrot.lane.b32.xlu0 %v176, 16
    %v186 = vpop.permute.xlu0 %185
    %187 = vrot.lane.b32.xlu0 %v179, 16
    %v188 = vpop.permute.xlu0 %187
    %189 = vrot.lane.b32.xlu0 %v182, 16
    %v190 = vpop.permute.xlu0 %189
    %v191 = vsel %vm110, %v184, %v30
    %v192 = vsel %vm110, %v186, %v31
    %v193 = vsel %vm110, %v188, %v32
    %v194 = vsel %vm110, %v190, %v33
    %v195 = vmul.f32 %v191, %v145
    %v196 = vmul.f32 %v192, %v145
    %v197 = vmul.f32 %v193, %v145
    %v198 = vmul.f32 %v194, %v145
    %203 = vrot.lane.b32.xlu0 %v69, 15
    %v204 = vpop.permute.xlu0 %203
    %205 = vrot.lane.b32.xlu0 %v70, 15
    %v206 = vpop.permute.xlu0 %205
    %207 = vrot.lane.b32.xlu0 %v71, 15
    %v208 = vpop.permute.xlu0 %207
    %209 = vrot.lane.b32.xlu0 %v72, 15
    %v210 = vpop.permute.xlu0 %209
    %v215 = vadd.f32 %v195, %v204
    %v216 = vadd.f32 %v196, %v206
    %v217 = vadd.f32 %v197, %v208
    %v218 = vadd.f32 %v198, %v210
    %v219 = vmul.f32 %v191, %v137
    %v220 = vmul.f32 %v192, %v137
    %v221 = vmul.f32 %v193, %v137
    %v222 = vmul.f32 %v194, %v137
    %227 = vrot.lane.b32.xlu0 %v219, 14
    %v228 = vpop.permute.xlu0 %227
    %229 = vrot.lane.b32.xlu0 %v220, 14
    %v230 = vpop.permute.xlu0 %229
    %231 = vrot.lane.b32.xlu0 %v221, 14
    %v232 = vpop.permute.xlu0 %231
    %233 = vrot.lane.b32.xlu0 %v222, 14
    %v234 = vpop.permute.xlu0 %233
    %v239 = vadd.f32 %v215, %v228
    %v240 = vadd.f32 %v216, %v230
    %v241 = vadd.f32 %v217, %v232
    %v242 = vadd.f32 %v218, %v234
    %247 = vrot.lane.b32.xlu0 %v239, 113
    %v248 = vpop.permute.xlu0 %247
    %249 = vrot.lane.b32.xlu0 %v240, 113
    %v250 = vpop.permute.xlu0 %249
    %251 = vrot.lane.b32.xlu0 %v241, 113
    %v252 = vpop.permute.xlu0 %251
    %253 = vrot.lane.b32.xlu0 %v242, 113
    %v254 = vpop.permute.xlu0 %253
    %v259 = vrot.slane %v248, 7
    %v260 = vrot.slane %v250, 7
    %v261 = vrot.slane %v252, 7
    %v262 = vrot.slane %v254, 7
    %v263 = vsel %vm40, %v261, %v262
    %v264 = vsel %vm40, %v260, %v261
    %v265 = vsel %vm40, %v259, %v260
    %v266 = vsel %vm40, %v262, %v259
    %v267 = vmul.f32 %v266, %v48
    %v268 = vmul.f32 %v265, %v53
    %v269 = vmul.f32 %v264, %v58
    %v270 = vmul.f32 %v263, %v63
    %v271 = vrot.slane %v248, 1
    %v272 = vrot.slane %v250, 1
    %v273 = vrot.slane %v252, 1
    %v274 = vrot.slane %v254, 1
    %v275 = vsel %vm81, %v273, %v274
    %v276 = vsel %vm81, %v272, %v273
    %v277 = vsel %vm81, %v271, %v272
    %v278 = vsel %vm81, %v274, %v271
    %v279 = vmul.f32 %v277, %v88
    %v280 = vmul.f32 %v276, %v92
    %v281 = vmul.f32 %v275, %v96
    %v282 = vmul.f32 %v278, %v100
    %v283 = vsub.f32 %v267, %v279
    %v284 = vsub.f32 %v268, %v280
    %v285 = vsub.f32 %v269, %v281
    %v286 = vsub.f32 %v270, %v282
    %v287 = vand.u32 2147483647, %v167
    %v288 = vand.u32 2147483647, %v168
    %v289 = vand.u32 2147483647, %v169
    %v290 = vand.u32 2147483647, %v170
    %v291 = vand.u32 2147483647, %v283
    %v292 = vand.u32 2147483647, %v284
    %v293 = vand.u32 2147483647, %v285
    %v294 = vand.u32 2147483647, %v286
    %299 = vrot.lane.b32.xlu0 %v291, 1
    %v300 = vpop.permute.xlu0 %299
    %301 = vrot.lane.b32.xlu0 %v292, 1
    %v302 = vpop.permute.xlu0 %301
    %303 = vrot.lane.b32.xlu0 %v293, 1
    %v304 = vpop.permute.xlu0 %303
    %305 = vrot.lane.b32.xlu0 %v294, 1
    %v306 = vpop.permute.xlu0 %305
    %v311 = vadd.f32 %v287, %v300
    %v312 = vadd.f32 %v288, %v302
    %v313 = vadd.f32 %v289, %v304
    %v314 = vadd.f32 %v290, %v306
    %v315 = vld [vmem:[%s1] sm:$0xff]
    %v316 = vld [vmem:[%s1 + $0x8] sm:$0xff]
    %v317 = vld [vmem:[%s1 + $0x10] sm:$0xff]
    %v318 = vld [vmem:[%s1 + $0x18] sm:$0xff]
    %v319 = vrot.slane %v315, 7
    %v320 = vrot.slane %v316, 7
    %v321 = vrot.slane %v317, 7
    %v322 = vrot.slane %v318, 7
    %v323 = vsel %vm40, %v321, %v322
    %v324 = vsel %vm40, %v320, %v321
    %v325 = vsel %vm40, %v319, %v320
    %v326 = vsel %vm40, %v322, %v319
    %v327 = vmul.f32 %v326, %v48
    %v328 = vmul.f32 %v325, %v53
    %v329 = vmul.f32 %v324, %v58
    %v330 = vmul.f32 %v323, %v63
    %v331 = vmul.f32 %v315, 2.0
    %v332 = vmul.f32 %v316, 2.0
    %v333 = vmul.f32 %v317, 2.0
    %v334 = vmul.f32 %v318, 2.0
    %v335 = vadd.f32 %v327, %v331
    %v336 = vadd.f32 %v328, %v332
    %v337 = vadd.f32 %v329, %v333
    %v338 = vadd.f32 %v330, %v334
    %v339 = vrot.slane %v315, 1
    %v340 = vrot.slane %v316, 1
    %v341 = vrot.slane %v317, 1
    %v342 = vrot.slane %v318, 1
    %v343 = vsel %vm81, %v341, %v342
    %v344 = vsel %vm81, %v340, %v341
    %v345 = vsel %vm81, %v339, %v340
    %v346 = vsel %vm81, %v342, %v339
    %v347 = vmul.f32 %v345, %v88
    %v348 = vmul.f32 %v344, %v92
    %v349 = vmul.f32 %v343, %v96
    %v350 = vmul.f32 %v346, %v100
    %v351 = vadd.f32 %v335, %v347
    %v352 = vadd.f32 %v336, %v348
    %v353 = vadd.f32 %v337, %v349
    %v354 = vadd.f32 %v338, %v350
    %355 = vrot.lane.b32.xlu0 %v351, 16
    %v356 = vpop.permute.xlu0 %355
    %v357 = vsel %vm110, %v356, %v351
    %358 = vrot.lane.b32.xlu0 %v352, 16
    %v359 = vpop.permute.xlu0 %358
    %v360 = vsel %vm110, %v359, %v352
    %361 = vrot.lane.b32.xlu0 %v353, 16
    %v362 = vpop.permute.xlu0 %361
    %v363 = vsel %vm110, %v362, %v353
    %364 = vrot.lane.b32.xlu0 %v354, 16
    %v365 = vpop.permute.xlu0 %364
    %v366 = vsel %vm110, %v365, %v354
    %367 = vrot.lane.b32.xlu0 %v357, 16
    %v368 = vpop.permute.xlu0 %367
    %369 = vrot.lane.b32.xlu0 %v360, 16
    %v370 = vpop.permute.xlu0 %369
    %371 = vrot.lane.b32.xlu0 %v363, 16
    %v372 = vpop.permute.xlu0 %371
    %373 = vrot.lane.b32.xlu0 %v366, 16
    %v374 = vpop.permute.xlu0 %373
    %v375 = vsel %vm110, %v368, %v351
    %v376 = vsel %vm110, %v370, %v352
    %v377 = vsel %vm110, %v372, %v353
    %v378 = vsel %vm110, %v374, %v354
    %v379 = vmul.f32 %v375, %v137
    %v380 = vmul.f32 %v376, %v137
    %v381 = vmul.f32 %v377, %v137
    %v382 = vmul.f32 %v378, %v137
    %v383 = vmul.f32 %v375, %v145
    %v384 = vmul.f32 %v376, %v145
    %v385 = vmul.f32 %v377, %v145
    %v386 = vmul.f32 %v378, %v145
    %391 = vrot.lane.b32.xlu0 %v383, 114
    %v392 = vpop.permute.xlu0 %391
    %393 = vrot.lane.b32.xlu0 %v384, 114
    %v394 = vpop.permute.xlu0 %393
    %395 = vrot.lane.b32.xlu0 %v385, 114
    %v396 = vpop.permute.xlu0 %395
    %397 = vrot.lane.b32.xlu0 %v386, 114
    %v398 = vpop.permute.xlu0 %397
    %v403 = vsub.f32 %v379, %v392
    %v404 = vsub.f32 %v380, %v394
    %v405 = vsub.f32 %v381, %v396
    %v406 = vsub.f32 %v382, %v398
    %407 = vrot.lane.b32.xlu0 %v315, 16
    %v408 = vpop.permute.xlu0 %407
    %v409 = vsel %vm110, %v408, %v315
    %410 = vrot.lane.b32.xlu0 %v316, 16
    %v411 = vpop.permute.xlu0 %410
    %v412 = vsel %vm110, %v411, %v316
    %413 = vrot.lane.b32.xlu0 %v317, 16
    %v414 = vpop.permute.xlu0 %413
    %v415 = vsel %vm110, %v414, %v317
    %416 = vrot.lane.b32.xlu0 %v318, 16
    %v417 = vpop.permute.xlu0 %416
    %v418 = vsel %vm110, %v417, %v318
    %419 = vrot.lane.b32.xlu0 %v409, 16
    %v420 = vpop.permute.xlu0 %419
    %421 = vrot.lane.b32.xlu0 %v412, 16
    %v422 = vpop.permute.xlu0 %421
    %423 = vrot.lane.b32.xlu0 %v415, 16
    %v424 = vpop.permute.xlu0 %423
    %425 = vrot.lane.b32.xlu0 %v418, 16
    %v426 = vpop.permute.xlu0 %425
    %v427 = vsel %vm110, %v420, %v315
    %v428 = vsel %vm110, %v422, %v316
    %v429 = vsel %vm110, %v424, %v317
    %v430 = vsel %vm110, %v426, %v318
    %v431 = vmul.f32 %v427, %v145
    %v432 = vmul.f32 %v428, %v145
    %v433 = vmul.f32 %v429, %v145
    %v434 = vmul.f32 %v430, %v145
    %439 = vrot.lane.b32.xlu0 %v331, 15
    %v440 = vpop.permute.xlu0 %439
    %441 = vrot.lane.b32.xlu0 %v332, 15
    %v442 = vpop.permute.xlu0 %441
    %443 = vrot.lane.b32.xlu0 %v333, 15
    %v444 = vpop.permute.xlu0 %443
    %445 = vrot.lane.b32.xlu0 %v334, 15
    %v446 = vpop.permute.xlu0 %445
    %v451 = vadd.f32 %v431, %v440
    %v452 = vadd.f32 %v432, %v442
    %v453 = vadd.f32 %v433, %v444
    %v454 = vadd.f32 %v434, %v446
    %v455 = vmul.f32 %v427, %v137
    %v456 = vmul.f32 %v428, %v137
    %v457 = vmul.f32 %v429, %v137
    %v458 = vmul.f32 %v430, %v137
    %463 = vrot.lane.b32.xlu0 %v455, 14
    %v464 = vpop.permute.xlu0 %463
    %465 = vrot.lane.b32.xlu0 %v456, 14
    %v466 = vpop.permute.xlu0 %465
    %467 = vrot.lane.b32.xlu0 %v457, 14
    %v468 = vpop.permute.xlu0 %467
    %469 = vrot.lane.b32.xlu0 %v458, 14
    %v470 = vpop.permute.xlu0 %469
    %v475 = vadd.f32 %v451, %v464
    %v476 = vadd.f32 %v452, %v466
    %v477 = vadd.f32 %v453, %v468
    %v478 = vadd.f32 %v454, %v470
    %483 = vrot.lane.b32.xlu0 %v475, 113
    %v484 = vpop.permute.xlu0 %483
    %485 = vrot.lane.b32.xlu0 %v476, 113
    %v486 = vpop.permute.xlu0 %485
    %487 = vrot.lane.b32.xlu0 %v477, 113
    %v488 = vpop.permute.xlu0 %487
    %489 = vrot.lane.b32.xlu0 %v478, 113
    %v490 = vpop.permute.xlu0 %489
    %v495 = vrot.slane %v484, 7
    %v496 = vrot.slane %v486, 7
    %v497 = vrot.slane %v488, 7
    %v498 = vrot.slane %v490, 7
    %v499 = vsel %vm40, %v497, %v498
    %v500 = vsel %vm40, %v496, %v497
    %v501 = vsel %vm40, %v495, %v496
    %v502 = vsel %vm40, %v498, %v495
    %v503 = vmul.f32 %v502, %v48
    %v504 = vmul.f32 %v501, %v53
    %v505 = vmul.f32 %v500, %v58
    %v506 = vmul.f32 %v499, %v63
    %v507 = vrot.slane %v484, 1
    %v508 = vrot.slane %v486, 1
    %v509 = vrot.slane %v488, 1
    %v510 = vrot.slane %v490, 1
    %v511 = vsel %vm81, %v509, %v510
    %v512 = vsel %vm81, %v508, %v509
    %v513 = vsel %vm81, %v507, %v508
    %v514 = vsel %vm81, %v510, %v507
    %v515 = vmul.f32 %v513, %v88
    %v516 = vmul.f32 %v512, %v92
    %v517 = vmul.f32 %v511, %v96
    %v518 = vmul.f32 %v514, %v100
    %v519 = vsub.f32 %v503, %v515
    %v520 = vsub.f32 %v504, %v516
    %v521 = vsub.f32 %v505, %v517
    %v522 = vsub.f32 %v506, %v518
    %v523 = vand.u32 2147483647, %v403
    %v524 = vand.u32 2147483647, %v404
    %v525 = vand.u32 2147483647, %v405
    %v526 = vand.u32 2147483647, %v406
    %v527 = vand.u32 2147483647, %v519
    %v528 = vand.u32 2147483647, %v520
    %v529 = vand.u32 2147483647, %v521
    %v530 = vand.u32 2147483647, %v522
    %535 = vrot.lane.b32.xlu0 %v527, 1
    %v536 = vpop.permute.xlu0 %535
    %537 = vrot.lane.b32.xlu0 %v528, 1
    %v538 = vpop.permute.xlu0 %537
    %539 = vrot.lane.b32.xlu0 %v529, 1
    %v540 = vpop.permute.xlu0 %539
    %541 = vrot.lane.b32.xlu0 %v530, 1
    %v542 = vpop.permute.xlu0 %541
    %v547 = vadd.f32 %v523, %v536
    %v548 = vadd.f32 %v524, %v538
    %v549 = vadd.f32 %v525, %v540
    %v550 = vadd.f32 %v526, %v542
    %v551 = vld [vmem:[%s2] sm:$0xff]
    %v552 = vld [vmem:[%s2 + $0x8] sm:$0xff]
    %v553 = vld [vmem:[%s2 + $0x10] sm:$0xff]
    %v554 = vld [vmem:[%s2 + $0x18] sm:$0xff]
    %v555 = vrot.slane %v551, 7
    %v556 = vrot.slane %v552, 7
    %v557 = vrot.slane %v553, 7
    %v558 = vrot.slane %v554, 7
    %v559 = vsel %vm40, %v557, %v558
    %v560 = vsel %vm40, %v556, %v557
    %v561 = vsel %vm40, %v555, %v556
    %v562 = vsel %vm40, %v558, %v555
    %v563 = vmul.f32 %v562, %v48
    %v564 = vmul.f32 %v561, %v53
    %v565 = vmul.f32 %v560, %v58
    %v566 = vmul.f32 %v559, %v63
    %v567 = vmul.f32 %v551, 2.0
    %v568 = vmul.f32 %v552, 2.0
    %v569 = vmul.f32 %v553, 2.0
    %v570 = vmul.f32 %v554, 2.0
    %v571 = vadd.f32 %v563, %v567
    %v572 = vadd.f32 %v564, %v568
    %v573 = vadd.f32 %v565, %v569
    %v574 = vadd.f32 %v566, %v570
    %v575 = vrot.slane %v551, 1
    %v576 = vrot.slane %v552, 1
    %v577 = vrot.slane %v553, 1
    %v578 = vrot.slane %v554, 1
    %v579 = vsel %vm81, %v577, %v578
    %v580 = vsel %vm81, %v576, %v577
    %v581 = vsel %vm81, %v575, %v576
    %v582 = vsel %vm81, %v578, %v575
    %v583 = vmul.f32 %v581, %v88
    %v584 = vmul.f32 %v580, %v92
    %v585 = vmul.f32 %v579, %v96
    %v586 = vmul.f32 %v582, %v100
    %v587 = vadd.f32 %v571, %v583
    %v588 = vadd.f32 %v572, %v584
    %v589 = vadd.f32 %v573, %v585
    %v590 = vadd.f32 %v574, %v586
    %591 = vrot.lane.b32.xlu0 %v587, 16
    %v592 = vpop.permute.xlu0 %591
    %v593 = vsel %vm110, %v592, %v587
    %594 = vrot.lane.b32.xlu0 %v588, 16
    %v595 = vpop.permute.xlu0 %594
    %v596 = vsel %vm110, %v595, %v588
    %597 = vrot.lane.b32.xlu0 %v589, 16
    %v598 = vpop.permute.xlu0 %597
    %v599 = vsel %vm110, %v598, %v589
    %600 = vrot.lane.b32.xlu0 %v590, 16
    %v601 = vpop.permute.xlu0 %600
    %v602 = vsel %vm110, %v601, %v590
    %603 = vrot.lane.b32.xlu0 %v593, 16
    %v604 = vpop.permute.xlu0 %603
    %605 = vrot.lane.b32.xlu0 %v596, 16
    %v606 = vpop.permute.xlu0 %605
    %607 = vrot.lane.b32.xlu0 %v599, 16
    %v608 = vpop.permute.xlu0 %607
    %609 = vrot.lane.b32.xlu0 %v602, 16
    %v610 = vpop.permute.xlu0 %609
    %v611 = vsel %vm110, %v604, %v587
    %v612 = vsel %vm110, %v606, %v588
    %v613 = vsel %vm110, %v608, %v589
    %v614 = vsel %vm110, %v610, %v590
    %v615 = vmul.f32 %v611, %v137
    %v616 = vmul.f32 %v612, %v137
    %v617 = vmul.f32 %v613, %v137
    %v618 = vmul.f32 %v614, %v137
    %v619 = vmul.f32 %v611, %v145
    %v620 = vmul.f32 %v612, %v145
    %v621 = vmul.f32 %v613, %v145
    %v622 = vmul.f32 %v614, %v145
    %627 = vrot.lane.b32.xlu0 %v619, 114
    %v628 = vpop.permute.xlu0 %627
    %629 = vrot.lane.b32.xlu0 %v620, 114
    %v630 = vpop.permute.xlu0 %629
    %631 = vrot.lane.b32.xlu0 %v621, 114
    %v632 = vpop.permute.xlu0 %631
    %633 = vrot.lane.b32.xlu0 %v622, 114
    %v634 = vpop.permute.xlu0 %633
    %v639 = vsub.f32 %v615, %v628
    %v640 = vsub.f32 %v616, %v630
    %v641 = vsub.f32 %v617, %v632
    %v642 = vsub.f32 %v618, %v634
    %643 = vrot.lane.b32.xlu0 %v551, 16
    %v644 = vpop.permute.xlu0 %643
    %v645 = vsel %vm110, %v644, %v551
    %646 = vrot.lane.b32.xlu0 %v552, 16
    %v647 = vpop.permute.xlu0 %646
    %v648 = vsel %vm110, %v647, %v552
    %649 = vrot.lane.b32.xlu0 %v553, 16
    %v650 = vpop.permute.xlu0 %649
    %v651 = vsel %vm110, %v650, %v553
    %652 = vrot.lane.b32.xlu0 %v554, 16
    %v653 = vpop.permute.xlu0 %652
    %v654 = vsel %vm110, %v653, %v554
    %655 = vrot.lane.b32.xlu0 %v645, 16
    %v656 = vpop.permute.xlu0 %655
    %657 = vrot.lane.b32.xlu0 %v648, 16
    %v658 = vpop.permute.xlu0 %657
    %659 = vrot.lane.b32.xlu0 %v651, 16
    %v660 = vpop.permute.xlu0 %659
    %661 = vrot.lane.b32.xlu0 %v654, 16
    %v662 = vpop.permute.xlu0 %661
    %v663 = vsel %vm110, %v656, %v551
    %v664 = vsel %vm110, %v658, %v552
    %v665 = vsel %vm110, %v660, %v553
    %v666 = vsel %vm110, %v662, %v554
    %v667 = vmul.f32 %v663, %v145
    %v668 = vmul.f32 %v664, %v145
    %v669 = vmul.f32 %v665, %v145
    %v670 = vmul.f32 %v666, %v145
    %675 = vrot.lane.b32.xlu0 %v567, 15
    %v676 = vpop.permute.xlu0 %675
    %677 = vrot.lane.b32.xlu0 %v568, 15
    %v678 = vpop.permute.xlu0 %677
    %679 = vrot.lane.b32.xlu0 %v569, 15
    %v680 = vpop.permute.xlu0 %679
    %681 = vrot.lane.b32.xlu0 %v570, 15
    %v682 = vpop.permute.xlu0 %681
    %v687 = vadd.f32 %v667, %v676
    %v688 = vadd.f32 %v668, %v678
    %v689 = vadd.f32 %v669, %v680
    %v690 = vadd.f32 %v670, %v682
    %v691 = vmul.f32 %v663, %v137
    %v692 = vmul.f32 %v664, %v137
    %v693 = vmul.f32 %v665, %v137
    %v694 = vmul.f32 %v666, %v137
    %699 = vrot.lane.b32.xlu0 %v691, 14
    %v700 = vpop.permute.xlu0 %699
    %701 = vrot.lane.b32.xlu0 %v692, 14
    %v702 = vpop.permute.xlu0 %701
    %703 = vrot.lane.b32.xlu0 %v693, 14
    %v704 = vpop.permute.xlu0 %703
    %705 = vrot.lane.b32.xlu0 %v694, 14
    %v706 = vpop.permute.xlu0 %705
    %v711 = vadd.f32 %v687, %v700
    %v712 = vadd.f32 %v688, %v702
    %v713 = vadd.f32 %v689, %v704
    %v714 = vadd.f32 %v690, %v706
    %719 = vrot.lane.b32.xlu0 %v711, 113
    %v720 = vpop.permute.xlu0 %719
    %721 = vrot.lane.b32.xlu0 %v712, 113
    %v722 = vpop.permute.xlu0 %721
    %723 = vrot.lane.b32.xlu0 %v713, 113
    %v724 = vpop.permute.xlu0 %723
    %725 = vrot.lane.b32.xlu0 %v714, 113
    %v726 = vpop.permute.xlu0 %725
    %v731 = vrot.slane %v720, 7
    %v732 = vrot.slane %v722, 7
    %v733 = vrot.slane %v724, 7
    %v734 = vrot.slane %v726, 7
    %v735 = vsel %vm40, %v733, %v734
    %v736 = vsel %vm40, %v732, %v733
    %v737 = vsel %vm40, %v731, %v732
    %v738 = vsel %vm40, %v734, %v731
    %v739 = vmul.f32 %v738, %v48
    %v740 = vmul.f32 %v737, %v53
    %v741 = vmul.f32 %v736, %v58
    %v742 = vmul.f32 %v735, %v63
    %v743 = vrot.slane %v720, 1
    %v744 = vrot.slane %v722, 1
    %v745 = vrot.slane %v724, 1
    %v746 = vrot.slane %v726, 1
    %v747 = vsel %vm81, %v745, %v746
    %v748 = vsel %vm81, %v744, %v745
    %v749 = vsel %vm81, %v743, %v744
    %v750 = vsel %vm81, %v746, %v743
    %v751 = vmul.f32 %v749, %v88
    %v752 = vmul.f32 %v748, %v92
    %v753 = vmul.f32 %v747, %v96
    %v754 = vmul.f32 %v750, %v100
    %v755 = vsub.f32 %v739, %v751
    %v756 = vsub.f32 %v740, %v752
    %v757 = vsub.f32 %v741, %v753
    %v758 = vsub.f32 %v742, %v754
    %v759 = vand.u32 2147483647, %v639
    %v760 = vand.u32 2147483647, %v640
    %v761 = vand.u32 2147483647, %v641
    %v762 = vand.u32 2147483647, %v642
    %v763 = vand.u32 2147483647, %v755
    %v764 = vand.u32 2147483647, %v756
    %v765 = vand.u32 2147483647, %v757
    %v766 = vand.u32 2147483647, %v758
    %771 = vrot.lane.b32.xlu0 %v763, 1
    %v772 = vpop.permute.xlu0 %771
    %773 = vrot.lane.b32.xlu0 %v764, 1
    %v774 = vpop.permute.xlu0 %773
    %775 = vrot.lane.b32.xlu0 %v765, 1
    %v776 = vpop.permute.xlu0 %775
    %777 = vrot.lane.b32.xlu0 %v766, 1
    %v778 = vpop.permute.xlu0 %777
    %v783 = vadd.f32 %v759, %v772
    %v784 = vadd.f32 %v760, %v774
    %v785 = vadd.f32 %v761, %v776
    %v786 = vadd.f32 %v762, %v778
    %v787 = vmax.f32 %v311, %v547
    %v788 = vmax.f32 %v312, %v548
    %v789 = vmax.f32 %v313, %v549
    %v790 = vmax.f32 %v314, %v550
    %v791 = vsub.f32 %v783, %v787
    %v792 = vsub.f32 %v784, %v788
    %v793 = vsub.f32 %v785, %v789
    %v794 = vsub.f32 %v786, %v790
    %v795 = vand.u32 2147483647, %v791
    %v796 = vand.u32 2147483647, %v792
    %v797 = vand.u32 2147483647, %v793
    %v798 = vand.u32 2147483647, %v794
    %803 = vrot.lane.b32.xlu0 %v795, 127
    %v804 = vpop.permute.xlu0 %803
    %805 = vrot.lane.b32.xlu0 %v796, 127
    %v806 = vpop.permute.xlu0 %805
    %807 = vrot.lane.b32.xlu0 %v797, 127
    %v808 = vpop.permute.xlu0 %807
    %809 = vrot.lane.b32.xlu0 %v798, 127
    %v810 = vpop.permute.xlu0 %809
    %vm815 = vcmask 130048
    %v816 = vsel %vm815, %v804, 0.0
    %v817 = vsel %vm815, %v806, 0.0
    %v818 = vadd.f32 %v816, %v817
    %v819 = vsel %vm815, %v808, 0.0
    %v820 = vadd.f32 %v818, %v819
    %v821 = vsel %vm815, %v810, 0.0
    %v822 = vadd.f32 %v820, %v821
    %823 = vadd.xlane.f32.xlu0 %v822
    %v824 = vpop.xlane.xlu0 %823
    %v825 = vrot.slane %v824, 4
    %v826 = vadd.f32 %v824, %v825
    %v827 = vrot.slane %v826, 2
    %v828 = vadd.f32 %v826, %v827
    %v829 = vrot.slane %v828, 1
    %v830 = vadd.f32 %v828, %v829
    %s831 = vtos %v830
    %v832 = vstv %s831
    %833 = vst [vmem:[#allocation2] sm:$0xff] %v832
    // Predicated region
    $region18: #{tpu_custom_call.1} parent=1 // pred_check
      _
    $region19: #{tpu_custom_call.1} parent=1 // pred_check_branch
      %835 = sbr.rel (0) target = $region21
    $region20: #{tpu_custom_call.1} parent=1 // pred_region
      %837 = vsyncadd [#allocation3], 0
      %s839 = sshll.u32 [#allocation2], 4
      %s840 = int_to_ptr.vmem [resolvable:$true] %s839
      %s841 = sshll.u32 %s4, 4
      %s842 = int_to_ptr.hbm [resolvable:$true] %s841
      %844 = dma.vmem_to_hbm [thread:$0]  %s840, 128, %s842, [#allocation3]
    $region21: #{tpu_custom_call.1} parent=1 // pred_fallthru
      _
    // Predicated region
    $region22: #{tpu_custom_call.1} parent=1 // pred_check
      _
    $region23: #{tpu_custom_call.1} parent=1 // pred_check_branch
      %846 = sbr.rel (0) target = $region25
    $region24: #{tpu_custom_call.1} parent=1 // pred_region
      %848 = dma.done [#allocation3], 128
    $region25: #{tpu_custom_call.1} parent=1 // pred_fallthru
      _
    %849 = vsyncpa [#allocation3], 1

</llo_original>
